<compile_context>
chip_gen: v7x
topology: tpu7x:2x2x1
jax: 0.10.0
libtpu: 0.0.40
codegen_flags: <defaults>
</compile_context>

<pallas_src>
import functools

import jax
import jax.numpy as jnp
from jax.experimental import pallas as pl
from jax.experimental.pallas import tpu as pltpu

LEAKY_SLOPE = 0.01  # PyTorch nn.LeakyReLU default negative_slope
LANE = 128
SUBLANE = 8


def _round_up(x, m):
    return ((x + m - 1) // m) * m


def _leaky_relu(x):
    # max(x, a*x) == LeakyReLU(x) for 0 < a < 1.
    return jnp.maximum(x, LEAKY_SLOPE * x)


def expert_kernel(x_ref, w1_ref, b1_ref, w2_ref, b2_ref, w3_ref, b3_ref, o_ref,
                  *, matmul_dtype):
    """Fused: LeakyReLU(LeakyReLU(LeakyReLU(x@W1+b1)@W2+b2)@W3+b3)."""
    x = x_ref[...].astype(matmul_dtype)

    h = jnp.dot(x, w1_ref[...].astype(matmul_dtype),
                preferred_element_type=jnp.float32)
    h = _leaky_relu(h + b1_ref[...].astype(jnp.float32))

    h = jnp.dot(h.astype(matmul_dtype), w2_ref[...].astype(matmul_dtype),
                preferred_element_type=jnp.float32)
    h = _leaky_relu(h + b2_ref[...].astype(jnp.float32))

    h = jnp.dot(h.astype(matmul_dtype), w3_ref[...].astype(matmul_dtype),
                preferred_element_type=jnp.float32)
    h = _leaky_relu(h + b3_ref[...].astype(jnp.float32))

    o_ref[...] = h.astype(o_ref.dtype)


@functools.partial(jax.jit, static_argnames=("block_b", "matmul_dtype"))
def expert_forward(x, params, block_b=512, matmul_dtype=jnp.float32):
    """x: (B, input_dim) float32. params: dict of w1,b1,w2,b2,w3,b3 (W as (in,out))."""
    B, Din = x.shape
    H1 = params["w1"].shape[1]
    H2 = params["w2"].shape[1]
    H3 = params["w3"].shape[1]  # output width derived from the *last* layer

    # ---- lane-dense padding of the feature dims ------------------------------
    DinP = _round_up(Din, LANE)
    H1P = _round_up(H1, LANE)
    H2P = _round_up(H2, LANE)
    H3P = _round_up(H3, LANE)

    def pad2(a, r, c):
        return jnp.pad(a, ((0, r - a.shape[0]), (0, c - a.shape[1])))

    w1 = pad2(params["w1"], DinP, H1P)
    w2 = pad2(params["w2"], H1P, H2P)
    w3 = pad2(params["w3"], H2P, H3P)
    b1 = pad2(params["b1"], 1, H1P)
    b2 = pad2(params["b2"], 1, H2P)
    b3 = pad2(params["b3"], 1, H3P)
    if matmul_dtype != jnp.float32:
        # Store weights in the matmul dtype (halves weight HBM traffic + VMEM).
        w1, w2, w3 = (w.astype(matmul_dtype) for w in (w1, w2, w3))

    # ---- batch tiling: many grid steps so the pipeline (and on v7x, both TCs)
    #      actually engage. Small batches just become a single full-size block.
    tb = max(SUBLANE, min(_round_up(block_b, SUBLANE), _round_up(B, SUBLANE)))
    Bp = _round_up(B, tb)
    x_p = jnp.pad(x, ((0, Bp - B), (0, DinP - Din)))
    grid = (Bp // tb,)

    # ---- specs ---------------------------------------------------------------
    x_spec = pl.BlockSpec((tb, DinP), lambda i: (i, 0))
    o_spec = pl.BlockSpec((tb, H3P), lambda i: (i, 0))

    def const_spec(shape):
        # Block never changes across the grid -> single-buffer it.
        return pl.BlockSpec(shape, lambda i: (0, 0), pipeline_mode=pl.Buffered(1))

    # ---- VMEM budget / cost estimate -----------------------------------------
    f32b = 4
    wb = jnp.dtype(matmul_dtype).itemsize
    weight_bytes = (DinP * H1P + H1P * H2P + H2P * H3P) * wb
    bias_bytes = (H1P + H2P + H3P) * f32b
    vmem_needed = (
        2 * tb * DinP * f32b                       # x tile, double-buffered
        + 2 * tb * H3P * f32b                      # out tile, double-buffered
        + weight_bytes + bias_bytes                # single-buffered constants
        + 3 * tb * max(H1P, H2P, H3P) * f32b       # live intermediates headroom
    )
    vmem_limit = int(min(max(2 * vmem_needed, 32 * 1024 * 1024),
                         100 * 1024 * 1024))

    cost = pl.CostEstimate(
        flops=2 * Bp * (DinP * H1P + H1P * H2P + H2P * H3P),
        transcendentals=0,
        bytes_accessed=(Bp * DinP * f32b + Bp * H3P * f32b
                        + weight_bytes + bias_bytes),
    )

    out_p = pl.pallas_call(
        functools.partial(expert_kernel, matmul_dtype=matmul_dtype),
        out_shape=jax.ShapeDtypeStruct((Bp, H3P), x.dtype),
        grid_spec=pltpu.PrefetchScalarGridSpec(
            num_scalar_prefetch=0,
            grid=grid,
            in_specs=[
                x_spec,
                const_spec((DinP, H1P)),  # w1
                const_spec((1, H1P)),     # b1
                const_spec((H1P, H2P)),   # w2
                const_spec((1, H2P)),     # b2
                const_spec((H2P, H3P)),   # w3
                const_spec((1, H3P)),     # b3
            ],
            out_specs=o_spec,
        ),
        compiler_params=pltpu.CompilerParams(
            dimension_semantics=("parallel",),
            vmem_limit_bytes=vmem_limit,
        ),
        cost_estimate=cost,
    )(x_p, w1, b1, w2, b2, w3, b3)

    return out_p[:B, :H3]


def init_expert_params(key, input_dim, hidden_dim, dtype=jnp.float32):
    """Deterministic init mimicking nn.Linear: U(-1/sqrt(fan_in), 1/sqrt(fan_in)).
    Weights stored pre-transposed as (in, out) so the kernel does x @ W + b."""
    keys = jax.random.split(key, 6)

    def linear(kw, kb, fan_in, fan_out):
        bound = 1.0 / jnp.sqrt(fan_in)
        w = jax.random.uniform(kw, (fan_in, fan_out), dtype, -bound, bound)
        b = jax.random.uniform(kb, (1, fan_out), dtype, -bound, bound)
        return w, b

    w1, b1 = linear(keys[0], keys[1], input_dim, hidden_dim)
    w2, b2 = linear(keys[2], keys[3], hidden_dim, hidden_dim)
    w3, b3 = linear(keys[4], keys[5], hidden_dim, hidden_dim)
    return {"w1": w1, "b1": b1, "w2": w2, "b2": b2, "w3": w3, "b3": b3}


def expert_reference(x, p):
    """Pure-JAX reference matching the PyTorch forward."""
    h = _leaky_relu(x @ p["w1"] + p["b1"])
    h = _leaky_relu(h @ p["w2"] + p["b2"])
    h = _leaky_relu(h @ p["w3"] + p["b3"])
    return h


if __name__ == "__main__":
    key = jax.random.PRNGKey(0)
    k_x, k_p = jax.random.split(key)

    batch, input_dim, hidden_dim = 8, 16, 32

    x = jax.random.normal(k_x, (batch, input_dim), dtype=jnp.float32)
    params = init_expert_params(k_p, input_dim, hidden_dim)

    out = expert_forward(x, params)          # f32 matmuls: matches the reference
    out = jax.block_until_ready(out)

    ref = expert_reference(x, params)
    assert out.shape == (batch, hidden_dim), out.shape
    assert jnp.allclose(out, ref, atol=1e-4, rtol=1e-4), "mismatch vs reference"

    # Optional fast path (bf16 operands, f32 accumulation) — looser tolerance.
    out_bf16 = jax.block_until_ready(
        expert_forward(x, params, matmul_dtype=jnp.bfloat16))
    assert jnp.allclose(out_bf16, ref, atol=5e-2, rtol=5e-2), "bf16 path mismatch"

    print("KERNEL_OK")
</pallas_src>

<mosaic_0001>
module attributes {stable_mosaic.version = 11 : i64} {
  func.func @expert_kernel(%arg0: i32, %arg1: memref<8x128xf32, #tpu.memory_space<vmem>>, %arg2: memref<128x128xf32, #tpu.memory_space<vmem>>, %arg3: memref<1x128xf32, #tpu.memory_space<vmem>>, %arg4: memref<128x128xf32, #tpu.memory_space<vmem>>, %arg5: memref<1x128xf32, #tpu.memory_space<vmem>>, %arg6: memref<128x128xf32, #tpu.memory_space<vmem>>, %arg7: memref<1x128xf32, #tpu.memory_space<vmem>>, %arg8: memref<8x128xf32, #tpu.memory_space<vmem>>) attributes {dimension_semantics = [#tpu.dimension_semantics<parallel>], iteration_bounds = array<i64: 1>, scalar_prefetch = 0 : i64, scratch_operands = 0 : i64, tpu.core_type = #tpu.core_type<tc>, window_params = [{transform_indices = @transform_0, window_bounds = array<i64: 8, 128>}, {pipeline_mode = #tpu.pipeline_mode<synchronous>, transform_indices = @transform_1, window_bounds = array<i64: 128, 128>}, {pipeline_mode = #tpu.pipeline_mode<synchronous>, transform_indices = @transform_2, window_bounds = array<i64: 1, 128>}, {pipeline_mode = #tpu.pipeline_mode<synchronous>, transform_indices = @transform_3, window_bounds = array<i64: 128, 128>}, {pipeline_mode = #tpu.pipeline_mode<synchronous>, transform_indices = @transform_4, window_bounds = array<i64: 1, 128>}, {pipeline_mode = #tpu.pipeline_mode<synchronous>, transform_indices = @transform_5, window_bounds = array<i64: 128, 128>}, {pipeline_mode = #tpu.pipeline_mode<synchronous>, transform_indices = @transform_6, window_bounds = array<i64: 1, 128>}, {transform_indices = @transform_7, window_bounds = array<i64: 8, 128>}]} {
    %c0 = arith.constant 0 : index
    %c0_0 = arith.constant 0 : index
    %0 = vector.load %arg1[%c0, %c0_0] : memref<8x128xf32, #tpu.memory_space<vmem>>, vector<8x128xf32>
    %c0_1 = arith.constant 0 : index
    %c0_2 = arith.constant 0 : index
    %1 = vector.load %arg2[%c0_1, %c0_2] : memref<128x128xf32, #tpu.memory_space<vmem>>, vector<128x128xf32>
    %cst = arith.constant dense<0.000000e+00> : vector<8x128xf32>
    %2 = tpu.matmul %0, %1, %cst {dimension_numbers = #tpu.dot_dimension_numbers<[1], [0], [0], [1], [0, 0, 1, 1], [], []>} : vector<8x128xf32>, vector<128x128xf32>, vector<8x128xf32> -> vector<8x128xf32>
    %c0_3 = arith.constant 0 : index
    %c0_4 = arith.constant 0 : index
    %3 = vector.load %arg3[%c0_3, %c0_4] : memref<1x128xf32, #tpu.memory_space<vmem>>, vector<1x128xf32>
    %4 = vector.broadcast %3 : vector<1x128xf32> to vector<8x128xf32>
    %5 = arith.addf %2, %4 : vector<8x128xf32>
    %cst_5 = arith.constant 0.00999999977 : f32
    %6 = vector.broadcast %cst_5 : f32 to vector<8x128xf32>
    %7 = arith.mulf %6, %5 : vector<8x128xf32>
    %8 = arith.maximumf %5, %7 : vector<8x128xf32>
    %c0_6 = arith.constant 0 : index
    %c0_7 = arith.constant 0 : index
    %9 = vector.load %arg4[%c0_6, %c0_7] : memref<128x128xf32, #tpu.memory_space<vmem>>, vector<128x128xf32>
    %cst_8 = arith.constant dense<0.000000e+00> : vector<8x128xf32>
    %10 = tpu.matmul %8, %9, %cst_8 {dimension_numbers = #tpu.dot_dimension_numbers<[1], [0], [0], [1], [0, 0, 1, 1], [], []>} : vector<8x128xf32>, vector<128x128xf32>, vector<8x128xf32> -> vector<8x128xf32>
    %c0_9 = arith.constant 0 : index
    %c0_10 = arith.constant 0 : index
    %11 = vector.load %arg5[%c0_9, %c0_10] : memref<1x128xf32, #tpu.memory_space<vmem>>, vector<1x128xf32>
    %12 = vector.broadcast %11 : vector<1x128xf32> to vector<8x128xf32>
    %13 = arith.addf %10, %12 : vector<8x128xf32>
    %cst_11 = arith.constant 0.00999999977 : f32
    %14 = vector.broadcast %cst_11 : f32 to vector<8x128xf32>
    %15 = arith.mulf %14, %13 : vector<8x128xf32>
    %16 = arith.maximumf %13, %15 : vector<8x128xf32>
    %c0_12 = arith.constant 0 : index
    %c0_13 = arith.constant 0 : index
    %17 = vector.load %arg6[%c0_12, %c0_13] : memref<128x128xf32, #tpu.memory_space<vmem>>, vector<128x128xf32>
    %cst_14 = arith.constant dense<0.000000e+00> : vector<8x128xf32>
    %18 = tpu.matmul %16, %17, %cst_14 {dimension_numbers = #tpu.dot_dimension_numbers<[1], [0], [0], [1], [0, 0, 1, 1], [], []>} : vector<8x128xf32>, vector<128x128xf32>, vector<8x128xf32> -> vector<8x128xf32>
    %c0_15 = arith.constant 0 : index
    %c0_16 = arith.constant 0 : index
    %19 = vector.load %arg7[%c0_15, %c0_16] : memref<1x128xf32, #tpu.memory_space<vmem>>, vector<1x128xf32>
    %20 = vector.broadcast %19 : vector<1x128xf32> to vector<8x128xf32>
    %21 = arith.addf %18, %20 : vector<8x128xf32>
    %cst_17 = arith.constant 0.00999999977 : f32
    %22 = vector.broadcast %cst_17 : f32 to vector<8x128xf32>
    %23 = arith.mulf %22, %21 : vector<8x128xf32>
    %24 = arith.maximumf %21, %23 : vector<8x128xf32>
    %c0_18 = arith.constant 0 : index
    %c0_19 = arith.constant 0 : index
    %25 = vector.load %arg8[%c0_18, %c0_19] : memref<8x128xf32, #tpu.memory_space<vmem>>, vector<8x128xf32>
    tpu.vector_store %arg8[%c0_18, %c0_19], %24 {strides = array<i32>} : memref<8x128xf32, #tpu.memory_space<vmem>>, vector<8x128xf32>,
    return
  }
  func.func @transform_0(%arg0: i32) -> (i32, i32) {
    %c0_i32 = arith.constant 0 : i32
    %c0_i32_0 = arith.constant 0 : i32
    return %arg0, %c0_i32 : i32, i32
  }
  func.func @transform_1(%arg0: i32) -> (i32, i32) {
    %c0_i32 = arith.constant 0 : i32
    %c0_i32_0 = arith.constant 0 : i32
    %c0_i32_1 = arith.constant 0 : i32
    return %c0_i32, %c0_i32_0 : i32, i32
  }
  func.func @transform_2(%arg0: i32) -> (i32, i32) {
    %c0_i32 = arith.constant 0 : i32
    %c0_i32_0 = arith.constant 0 : i32
    %c0_i32_1 = arith.constant 0 : i32
    return %c0_i32, %c0_i32_0 : i32, i32
  }
  func.func @transform_3(%arg0: i32) -> (i32, i32) {
    %c0_i32 = arith.constant 0 : i32
    %c0_i32_0 = arith.constant 0 : i32
    %c0_i32_1 = arith.constant 0 : i32
    return %c0_i32, %c0_i32_0 : i32, i32
  }
  func.func @transform_4(%arg0: i32) -> (i32, i32) {
    %c0_i32 = arith.constant 0 : i32
    %c0_i32_0 = arith.constant 0 : i32
    %c0_i32_1 = arith.constant 0 : i32
    return %c0_i32, %c0_i32_0 : i32, i32
  }
  func.func @transform_5(%arg0: i32) -> (i32, i32) {
    %c0_i32 = arith.constant 0 : i32
    %c0_i32_0 = arith.constant 0 : i32
    %c0_i32_1 = arith.constant 0 : i32
    return %c0_i32, %c0_i32_0 : i32, i32
  }
  func.func @transform_6(%arg0: i32) -> (i32, i32) {
    %c0_i32 = arith.constant 0 : i32
    %c0_i32_0 = arith.constant 0 : i32
    %c0_i32_1 = arith.constant 0 : i32
    return %c0_i32, %c0_i32_0 : i32, i32
  }
  func.func @transform_7(%arg0: i32) -> (i32, i32) {
    %c0_i32 = arith.constant 0 : i32
    %c0_i32_0 = arith.constant 0 : i32
    return %arg0, %c0_i32 : i32, i32
  }
}

</mosaic_0001>

<llo_original>
// kernel: expert_forward.1
$region0: #{expert_forward.1}
  #allocation0 [shape = 'u32[]', space=smem, size = 0x4, offset = 0x4, fixed_abs, tag = 'smem constant byte address 0x4 - core index']
  #allocation1 [shape = 'u32[144,128]{1,0:T(1,128)}', space=vmem, size = 0x12000, scoped, tag = 'internal scratch']
  %s0 = inlined_call_operand.vmem [shape: f32[8,128], index: 0, kind: input, shape index: {}]
  %s1 = inlined_call_operand.vmem [shape: f32[128,128], index: 1, kind: input, shape index: {}]
  %s2 = inlined_call_operand.vmem [shape: f32[1,128], index: 2, kind: input, shape index: {}]
  %s3 = inlined_call_operand.vmem [shape: f32[128,128], index: 3, kind: input, shape index: {}]
  %s4 = inlined_call_operand.vmem [shape: f32[1,128], index: 4, kind: input, shape index: {}]
  %s5 = inlined_call_operand.vmem [shape: f32[128,128], index: 5, kind: input, shape index: {}]
  %s6 = inlined_call_operand.vmem [shape: f32[1,128], index: 6, kind: input, shape index: {}]
  %s7 = inlined_call_operand.hbm [shape: f32[8,128], index: 7, kind: output, shape index: {}]
  %s8 = sld [smem:[#allocation0]]
  $region38: #{expert_forward.1} parent=0
    _
  %s10 = ssub.s32 1, %s8
  %s11 = scalar_select 0, %s10, %s8
  $region1: #{expert_forward.1} parent=0
    #allocation2 [shape = 'u8[4096]{0}', space=vmem, size = 0x1000, scoped, tag = 'output window, operand 0, single buffered']
    #allocation3 [shape = 's32[1]{0}', space=sflag, size = 0x4, scoped, tag = 'scoped memory for expert_forward.1']
    %12 = vsyncpa [#allocation3], 0
    // Predicated region
    $region2: #{expert_forward.1} parent=1 // pred_check
      _
    $region3: #{expert_forward.1} parent=1 // pred_check_branch
      %14 = sbr.rel (0) target = $region5
    $region4: #{expert_forward.1} parent=1 // pred_region
      _
    $region5: #{expert_forward.1} parent=1 // pred_fallthru
      _
    // Predicated region
    $region6: #{expert_forward.1} parent=1 // pred_check
      _
    $region7: #{expert_forward.1} parent=1 // pred_check_branch
      %16 = sbr.rel (0) target = $region9
    $region8: #{expert_forward.1} parent=1 // pred_region
      _
    $region9: #{expert_forward.1} parent=1 // pred_fallthru
      _
    // Predicated region
    $region10: #{expert_forward.1} parent=1 // pred_check
      _
    $region11: #{expert_forward.1} parent=1 // pred_check_branch
      %18 = sbr.rel (0) target = $region13
    $region12: #{expert_forward.1} parent=1 // pred_region
      _
    $region13: #{expert_forward.1} parent=1 // pred_fallthru
      _
    // Predicated region
    $region14: #{expert_forward.1} parent=1 // pred_check
      _
    $region15: #{expert_forward.1} parent=1 // pred_check_branch
      %20 = sbr.rel (0) target = $region17
    $region16: #{expert_forward.1} parent=1 // pred_region
      _
    $region17: #{expert_forward.1} parent=1 // pred_fallthru
      _
    // Predicated region
    $region18: #{expert_forward.1} parent=1 // pred_check
      _
    $region19: #{expert_forward.1} parent=1 // pred_check_branch
      %22 = sbr.rel (0) target = $region21
    $region20: #{expert_forward.1} parent=1 // pred_region
      _
    $region21: #{expert_forward.1} parent=1 // pred_fallthru
      _
    // Predicated region
    $region22: #{expert_forward.1} parent=1 // pred_check
      _
    $region23: #{expert_forward.1} parent=1 // pred_check_branch
      %24 = sbr.rel (0) target = $region25
    $region24: #{expert_forward.1} parent=1 // pred_region
      _
    $region25: #{expert_forward.1} parent=1 // pred_fallthru
      _
    // Predicated region
    $region26: #{expert_forward.1} parent=1 // pred_check
      _
    $region27: #{expert_forward.1} parent=1 // pred_check_branch
      %26 = sbr.rel (0) target = $region29
    $region28: #{expert_forward.1} parent=1 // pred_region
      _
    $region29: #{expert_forward.1} parent=1 // pred_fallthru
      _
    %v27 = vld [vmem:[%s0] sm:$0xff]
    %v28 = vld [vmem:[%s1] sm:$0xff]
    %v29 = vld [vmem:[%s1 + $0x8] sm:$0xff]
    %v30 = vld [vmem:[%s1 + $0x10] sm:$0xff]
    %v31 = vld [vmem:[%s1 + $0x18] sm:$0xff]
    %v32 = vld [vmem:[%s1 + $0x20] sm:$0xff]
    %v33 = vld [vmem:[%s1 + $0x28] sm:$0xff]
    %v34 = vld [vmem:[%s1 + $0x30] sm:$0xff]
    %v35 = vld [vmem:[%s1 + $0x38] sm:$0xff]
    %v36 = vld [vmem:[%s1 + $0x40] sm:$0xff]
    %v37 = vld [vmem:[%s1 + $0x48] sm:$0xff]
    %v38 = vld [vmem:[%s1 + $0x50] sm:$0xff]
    %v39 = vld [vmem:[%s1 + $0x58] sm:$0xff]
    %v40 = vld [vmem:[%s1 + $0x60] sm:$0xff]
    %v41 = vld [vmem:[%s1 + $0x68] sm:$0xff]
    %v42 = vld [vmem:[%s1 + $0x70] sm:$0xff]
    %v43 = vld [vmem:[%s1 + $0x78] sm:$0xff]
    %v44 = vld [vmem:[%s2] sm:$0x1]
    %v46 = vlaneseq
    %v47 = vshrl.u32 %v46, 7
    %v48 = vsub.s32 0, %v47
    %v49 = vrot.slane %v44, %v48
    %51 = vmatprep.subr.mxu0 0.0
    %52 = vmatpush1.msra.mxu0 %v28
    %53 = vmatprep.subr.mxu0 0.0
    %54 = vmatpush1.msra.mxu0 %v29
    %55 = vmatprep.subr.mxu0 0.0
    %56 = vmatpush1.msra.mxu0 %v30
    %57 = vmatprep.subr.mxu0 0.0
    %58 = vmatpush1.msra.mxu0 %v31
    %59 = vmatprep.subr.mxu0 0.0
    %60 = vmatpush1.msra.mxu0 %v32
    %61 = vmatprep.subr.mxu0 0.0
    %62 = vmatpush1.msra.mxu0 %v33
    %63 = vmatprep.subr.mxu0 0.0
    %64 = vmatpush1.msra.mxu0 %v34
    %65 = vmatprep.subr.mxu0 0.0
    %66 = vmatpush1.msra.mxu0 %v35
    %67 = vmatprep.subr.mxu0 0.0
    %68 = vmatpush1.msra.mxu0 %v36
    %69 = vmatprep.subr.mxu0 0.0
    %70 = vmatpush1.msra.mxu0 %v37
    %71 = vmatprep.subr.mxu0 0.0
    %72 = vmatpush1.msra.mxu0 %v38
    %73 = vmatprep.subr.mxu0 0.0
    %74 = vmatpush1.msra.mxu0 %v39
    %75 = vmatprep.subr.mxu0 0.0
    %76 = vmatpush1.msra.mxu0 %v40
    %77 = vmatprep.subr.mxu0 0.0
    %78 = vmatpush1.msra.mxu0 %v41
    %79 = vmatprep.subr.mxu0 0.0
    %80 = vmatpush1.msra.mxu0 %v42
    %81 = vmatprep.subr.mxu0 0.0
    %82 = vmatpush1.msra.mxu0 %v43
    %83 = vmatprep.subr.mxu0 0.0
    %84 = vmatpush1.msra.mxu0 0.0
    %85 = vmatprep.subr.mxu0 0.0
    %86 = vmatpush1.msra.mxu0 0.0
    %87 = vmatprep.subr.mxu0 0.0
    %88 = vmatpush1.msra.mxu0 0.0
    %89 = vmatprep.subr.mxu0 0.0
    %90 = vmatpush1.msra.mxu0 0.0
    %91 = vmatprep.subr.mxu0 0.0
    %92 = vmatpush1.msra.mxu0 0.0
    %93 = vmatprep.subr.mxu0 0.0
    %94 = vmatpush1.msra.mxu0 0.0
    %95 = vmatprep.subr.mxu0 0.0
    %96 = vmatpush1.msra.mxu0 0.0
    %97 = vmatprep.subr.mxu0 0.0
    %98 = vmatpush1.msra.mxu0 0.0
    %99 = vmatprep.subr.mxu0 0.0
    %100 = vmatpush1.msra.mxu0 0.0
    %101 = vmatprep.subr.mxu0 0.0
    %102 = vmatpush1.msra.mxu0 0.0
    %103 = vmatprep.subr.mxu0 0.0
    %104 = vmatpush1.msra.mxu0 0.0
    %105 = vmatprep.subr.mxu0 0.0
    %106 = vmatpush1.msra.mxu0 0.0
    %107 = vmatprep.subr.mxu0 0.0
    %108 = vmatpush1.msra.mxu0 0.0
    %109 = vmatprep.subr.mxu0 0.0
    %110 = vmatpush1.msra.mxu0 0.0
    %111 = vmatprep.subr.mxu0 0.0
    %112 = vmatpush1.msra.mxu0 0.0
    %113 = vmatprep.subr.mxu0 0.0
    %114 = vmatpush1.msra.mxu0 0.0
    %115 = vmatprep.mubr.f32.mxu0 0.0
    %116 = vmatmul.mubr.f32.gmra.mrb[0].mxu0 %v27
    %v117 = vpop.f32.mrb[0].mxu0
    %v118 = vadd.f32 %v49, %v117
    %v119 = vpop.f32.mrb[0].mxu0
    %120 = vdwg.mxu0
    %v121 = vmul.f32 %v118, 0.01
    %v122 = vmax.f32 %v118, %v121
    %v123 = vld [vmem:[%s3] sm:$0xff]
    %v124 = vld [vmem:[%s3 + $0x8] sm:$0xff]
    %v125 = vld [vmem:[%s3 + $0x10] sm:$0xff]
    %v126 = vld [vmem:[%s3 + $0x18] sm:$0xff]
    %v127 = vld [vmem:[%s3 + $0x20] sm:$0xff]
    %v128 = vld [vmem:[%s3 + $0x28] sm:$0xff]
    %v129 = vld [vmem:[%s3 + $0x30] sm:$0xff]
    %v130 = vld [vmem:[%s3 + $0x38] sm:$0xff]
    %v131 = vld [vmem:[%s3 + $0x40] sm:$0xff]
    %v132 = vld [vmem:[%s3 + $0x48] sm:$0xff]
    %v133 = vld [vmem:[%s3 + $0x50] sm:$0xff]
    %v134 = vld [vmem:[%s3 + $0x58] sm:$0xff]
    %v135 = vld [vmem:[%s3 + $0x60] sm:$0xff]
    %v136 = vld [vmem:[%s3 + $0x68] sm:$0xff]
    %v137 = vld [vmem:[%s3 + $0x70] sm:$0xff]
    %v138 = vld [vmem:[%s3 + $0x78] sm:$0xff]
    %v139 = vld [vmem:[%s4] sm:$0x1]
    %v141 = vlaneseq
    %v142 = vshrl.u32 %v141, 7
    %v143 = vsub.s32 0, %v142
    %v144 = vrot.slane %v139, %v143
    %146 = vmatprep.subr.mxu0 0.0
    %147 = vmatpush1.msra.mxu0 %v123
    %148 = vmatprep.subr.mxu0 0.0
    %149 = vmatpush1.msra.mxu0 %v124
    %150 = vmatprep.subr.mxu0 0.0
    %151 = vmatpush1.msra.mxu0 %v125
    %152 = vmatprep.subr.mxu0 0.0
    %153 = vmatpush1.msra.mxu0 %v126
    %154 = vmatprep.subr.mxu0 0.0
    %155 = vmatpush1.msra.mxu0 %v127
    %156 = vmatprep.subr.mxu0 0.0
    %157 = vmatpush1.msra.mxu0 %v128
    %158 = vmatprep.subr.mxu0 0.0
    %159 = vmatpush1.msra.mxu0 %v129
    %160 = vmatprep.subr.mxu0 0.0
    %161 = vmatpush1.msra.mxu0 %v130
    %162 = vmatprep.subr.mxu0 0.0
    %163 = vmatpush1.msra.mxu0 %v131
    %164 = vmatprep.subr.mxu0 0.0
    %165 = vmatpush1.msra.mxu0 %v132
    %166 = vmatprep.subr.mxu0 0.0
    %167 = vmatpush1.msra.mxu0 %v133
    %168 = vmatprep.subr.mxu0 0.0
    %169 = vmatpush1.msra.mxu0 %v134
    %170 = vmatprep.subr.mxu0 0.0
    %171 = vmatpush1.msra.mxu0 %v135
    %172 = vmatprep.subr.mxu0 0.0
    %173 = vmatpush1.msra.mxu0 %v136
    %174 = vmatprep.subr.mxu0 0.0
    %175 = vmatpush1.msra.mxu0 %v137
    %176 = vmatprep.subr.mxu0 0.0
    %177 = vmatpush1.msra.mxu0 %v138
    %178 = vmatprep.subr.mxu0 0.0
    %179 = vmatpush1.msra.mxu0 0.0
    %180 = vmatprep.subr.mxu0 0.0
    %181 = vmatpush1.msra.mxu0 0.0
    %182 = vmatprep.subr.mxu0 0.0
    %183 = vmatpush1.msra.mxu0 0.0
    %184 = vmatprep.subr.mxu0 0.0
    %185 = vmatpush1.msra.mxu0 0.0
    %186 = vmatprep.subr.mxu0 0.0
    %187 = vmatpush1.msra.mxu0 0.0
    %188 = vmatprep.subr.mxu0 0.0
    %189 = vmatpush1.msra.mxu0 0.0
    %190 = vmatprep.subr.mxu0 0.0
    %191 = vmatpush1.msra.mxu0 0.0
    %192 = vmatprep.subr.mxu0 0.0
    %193 = vmatpush1.msra.mxu0 0.0
    %194 = vmatprep.subr.mxu0 0.0
    %195 = vmatpush1.msra.mxu0 0.0
    %196 = vmatprep.subr.mxu0 0.0
    %197 = vmatpush1.msra.mxu0 0.0
    %198 = vmatprep.subr.mxu0 0.0
    %199 = vmatpush1.msra.mxu0 0.0
    %200 = vmatprep.subr.mxu0 0.0
    %201 = vmatpush1.msra.mxu0 0.0
    %202 = vmatprep.subr.mxu0 0.0
    %203 = vmatpush1.msra.mxu0 0.0
    %204 = vmatprep.subr.mxu0 0.0
    %205 = vmatpush1.msra.mxu0 0.0
    %206 = vmatprep.subr.mxu0 0.0
    %207 = vmatpush1.msra.mxu0 0.0
    %208 = vmatprep.subr.mxu0 0.0
    %209 = vmatpush1.msra.mxu0 0.0
    %210 = vmatprep.mubr.f32.mxu0 0.0
    %211 = vmatmul.mubr.f32.gmra.mrb[0].mxu0 %v122
    %v212 = vpop.f32.mrb[0].mxu0
    %v213 = vadd.f32 %v144, %v212
    %v214 = vpop.f32.mrb[0].mxu0
    %215 = vdwg.mxu0
    %v216 = vmul.f32 %v213, 0.01
    %v217 = vmax.f32 %v213, %v216
    %v218 = vld [vmem:[%s5] sm:$0xff]
    %v219 = vld [vmem:[%s5 + $0x8] sm:$0xff]
    %v220 = vld [vmem:[%s5 + $0x10] sm:$0xff]
    %v221 = vld [vmem:[%s5 + $0x18] sm:$0xff]
    %v222 = vld [vmem:[%s5 + $0x20] sm:$0xff]
    %v223 = vld [vmem:[%s5 + $0x28] sm:$0xff]
    %v224 = vld [vmem:[%s5 + $0x30] sm:$0xff]
    %v225 = vld [vmem:[%s5 + $0x38] sm:$0xff]
    %v226 = vld [vmem:[%s5 + $0x40] sm:$0xff]
    %v227 = vld [vmem:[%s5 + $0x48] sm:$0xff]
    %v228 = vld [vmem:[%s5 + $0x50] sm:$0xff]
    %v229 = vld [vmem:[%s5 + $0x58] sm:$0xff]
    %v230 = vld [vmem:[%s5 + $0x60] sm:$0xff]
    %v231 = vld [vmem:[%s5 + $0x68] sm:$0xff]
    %v232 = vld [vmem:[%s5 + $0x70] sm:$0xff]
    %v233 = vld [vmem:[%s5 + $0x78] sm:$0xff]
    %v234 = vld [vmem:[%s6] sm:$0x1]
    %v236 = vlaneseq
    %v237 = vshrl.u32 %v236, 7
    %v238 = vsub.s32 0, %v237
    %v239 = vrot.slane %v234, %v238
    %241 = vmatprep.subr.mxu0 0.0
    %242 = vmatpush1.msra.mxu0 %v218
    %243 = vmatprep.subr.mxu0 0.0
    %244 = vmatpush1.msra.mxu0 %v219
    %245 = vmatprep.subr.mxu0 0.0
    %246 = vmatpush1.msra.mxu0 %v220
    %247 = vmatprep.subr.mxu0 0.0
    %248 = vmatpush1.msra.mxu0 %v221
    %249 = vmatprep.subr.mxu0 0.0
    %250 = vmatpush1.msra.mxu0 %v222
    %251 = vmatprep.subr.mxu0 0.0
    %252 = vmatpush1.msra.mxu0 %v223
    %253 = vmatprep.subr.mxu0 0.0
    %254 = vmatpush1.msra.mxu0 %v224
    %255 = vmatprep.subr.mxu0 0.0
    %256 = vmatpush1.msra.mxu0 %v225
    %257 = vmatprep.subr.mxu0 0.0
    %258 = vmatpush1.msra.mxu0 %v226
    %259 = vmatprep.subr.mxu0 0.0
    %260 = vmatpush1.msra.mxu0 %v227
    %261 = vmatprep.subr.mxu0 0.0
    %262 = vmatpush1.msra.mxu0 %v228
    %263 = vmatprep.subr.mxu0 0.0
    %264 = vmatpush1.msra.mxu0 %v229
    %265 = vmatprep.subr.mxu0 0.0
    %266 = vmatpush1.msra.mxu0 %v230
    %267 = vmatprep.subr.mxu0 0.0
    %268 = vmatpush1.msra.mxu0 %v231
    %269 = vmatprep.subr.mxu0 0.0
    %270 = vmatpush1.msra.mxu0 %v232
    %271 = vmatprep.subr.mxu0 0.0
    %272 = vmatpush1.msra.mxu0 %v233
    %273 = vmatprep.subr.mxu0 0.0
    %274 = vmatpush1.msra.mxu0 0.0
    %275 = vmatprep.subr.mxu0 0.0
    %276 = vmatpush1.msra.mxu0 0.0
    %277 = vmatprep.subr.mxu0 0.0
    %278 = vmatpush1.msra.mxu0 0.0
    %279 = vmatprep.subr.mxu0 0.0
    %280 = vmatpush1.msra.mxu0 0.0
    %281 = vmatprep.subr.mxu0 0.0
    %282 = vmatpush1.msra.mxu0 0.0
    %283 = vmatprep.subr.mxu0 0.0
    %284 = vmatpush1.msra.mxu0 0.0
    %285 = vmatprep.subr.mxu0 0.0
    %286 = vmatpush1.msra.mxu0 0.0
    %287 = vmatprep.subr.mxu0 0.0
    %288 = vmatpush1.msra.mxu0 0.0
    %289 = vmatprep.subr.mxu0 0.0
    %290 = vmatpush1.msra.mxu0 0.0
    %291 = vmatprep.subr.mxu0 0.0
    %292 = vmatpush1.msra.mxu0 0.0
    %293 = vmatprep.subr.mxu0 0.0
    %294 = vmatpush1.msra.mxu0 0.0
    %295 = vmatprep.subr.mxu0 0.0
    %296 = vmatpush1.msra.mxu0 0.0
    %297 = vmatprep.subr.mxu0 0.0
    %298 = vmatpush1.msra.mxu0 0.0
    %299 = vmatprep.subr.mxu0 0.0
    %300 = vmatpush1.msra.mxu0 0.0
    %301 = vmatprep.subr.mxu0 0.0
    %302 = vmatpush1.msra.mxu0 0.0
    %303 = vmatprep.subr.mxu0 0.0
    %304 = vmatpush1.msra.mxu0 0.0
    %305 = vmatprep.mubr.f32.mxu0 0.0
    %306 = vmatmul.mubr.f32.gmra.mrb[0].mxu0 %v217
    %v307 = vpop.f32.mrb[0].mxu0
    %v308 = vadd.f32 %v239, %v307
    %v309 = vpop.f32.mrb[0].mxu0
    %310 = vdwg.mxu0
    %v311 = vmul.f32 %v308, 0.01
    %v312 = vmax.f32 %v308, %v311
    %313 = vst [vmem:[#allocation2] sm:$0xff] %v312
    // Predicated region
    $region30: #{expert_forward.1} parent=1 // pred_check
      _
    $region31: #{expert_forward.1} parent=1 // pred_check_branch
      %315 = sbr.rel (0) target = $region33
    $region32: #{expert_forward.1} parent=1 // pred_region
      %s317 = ssub.s32 128, 128
      %318 = vsyncadd [#allocation3], %s317
      %s320 = sshll.u32 [#allocation2], 4
      %s321 = int_to_ptr.vmem [resolvable:$true] %s320
      %323 = dma.vmem_to_hbm [thread:$0]  %s321, 128, %s7, [#allocation3]
    $region33: #{expert_forward.1} parent=1 // pred_fallthru
      _
    // Predicated region
    $region34: #{expert_forward.1} parent=1 // pred_check
      _
    $region35: #{expert_forward.1} parent=1 // pred_check_branch
      %325 = sbr.rel (0) target = $region37
    $region36: #{expert_forward.1} parent=1 // pred_region
      %326 = dma.done [#allocation3], 128
    $region37: #{expert_forward.1} parent=1 // pred_fallthru
      _
    %327 = vsyncpa [#allocation3], 1

</llo_original>
